<compile_context>
chip_gen: v7x
topology: tpu7x:2x2x1
jax: 0.10.0
libtpu: 0.0.40
codegen_flags: <defaults>
</compile_context>

<pallas_src>
import functools
import math

import jax
import jax.numpy as jnp
from jax import lax
from jax.experimental import pallas as pl
from jax.experimental.pallas import tpu as pltpu

LANES = 128
SLAB = 512                        # inner-loop slab rows; multiple of every sublane packing
SMALL_BUDGET = 12 * 1024 * 1024   # double-buffered input bytes; fits v5e's 16 MiB scoped VMEM
LARGE_BUDGET = 24 * 1024 * 1024   # fits the 32 MiB default scoped VMEM on v6e / v7x


def _round_up(x, m):
    return (x + m - 1) // m * m


def _block_byte_budget():
    """VMEM budget for the double-buffered streamed input blocks."""
    try:
        kind = jax.devices()[0].device_kind.lower()
    except Exception:
        kind = ""
    if ("v6" in kind) or ("v7" in kind):
        return LARGE_BUDGET
    return SMALL_BUDGET  # conservative on v5e / unknown (16 MiB default scoped limit)


def _masked_mse_kernel(xh_ref, xt_ref, m_ref, sum_ref, cnt_ref,
                       acc_sum, acc_cnt, *, row_tile, slab, rows, steps, ragged):
    i = pl.program_id(0)

    @pl.when(i == 0)
    def _init():
        acc_sum[...] = jnp.zeros_like(acc_sum)
        acc_cnt[...] = jnp.zeros_like(acc_cnt)

    n_slabs = row_tile // slab
    groups = slab // 8

    def accumulate(row_limit):
        # row_limit is None on the interior fast path; on the ragged edge block it is
        # the (traced) number of valid rows in this block — rows past it are garbage
        # read past the array edge and must contribute exactly zero.
        row_iota = None
        if row_limit is not None:
            row_iota = lax.broadcasted_iota(jnp.int32, (slab, LANES), 0)

        def body(s, carry):
            acc_s, acc_c = carry
            r0 = pl.multiple_of(s * slab, slab)
            xh = xh_ref[pl.ds(r0, slab), :].astype(jnp.float32)
            xt = xt_ref[pl.ds(r0, slab), :].astype(jnp.float32)
            diff = xh - xt
            valid = m_ref[pl.ds(r0, slab), :] > 0
            if row_limit is not None:
                valid = valid & ((row_iota + s * slab) < row_limit)
            # select (not multiply) so NaN/Inf garbage past the edge cannot leak
            sq = jnp.where(valid, diff * diff, jnp.float32(0.0))
            cnt = valid.astype(jnp.int32)
            acc_s = acc_s + sq.reshape(groups, 8, LANES).sum(axis=0)
            acc_c = acc_c + cnt.reshape(groups, 8, LANES).sum(axis=0)
            return acc_s, acc_c

        init = (jnp.zeros((8, LANES), jnp.float32),
                jnp.zeros((8, LANES), jnp.int32))
        acc_s, acc_c = lax.fori_loop(0, n_slabs, body, init, unroll=(n_slabs <= 4))
        acc_sum[...] += acc_s
        acc_cnt[...] += acc_c

    if ragged:
        @pl.when(i < steps - 1)
        def _interior():
            accumulate(None)

        @pl.when(i == steps - 1)
        def _edge():
            accumulate(rows - i * row_tile)
    else:
        accumulate(None)

    @pl.when(i == steps - 1)
    def _finalize():
        sum_ref[0] = jnp.sum(acc_sum[...])
        cnt_ref[0] = jnp.sum(acc_cnt[...])


def _unmasked_mse_kernel(xh_ref, xt_ref, sum_ref, acc_sum, *,
                         row_tile, slab, rows, steps, ragged):
    i = pl.program_id(0)

    @pl.when(i == 0)
    def _init():
        acc_sum[...] = jnp.zeros_like(acc_sum)

    n_slabs = row_tile // slab
    groups = slab // 8

    def accumulate(row_limit):
        row_iota = None
        if row_limit is not None:
            row_iota = lax.broadcasted_iota(jnp.int32, (slab, LANES), 0)

        def body(s, acc_s):
            r0 = pl.multiple_of(s * slab, slab)
            xh = xh_ref[pl.ds(r0, slab), :].astype(jnp.float32)
            xt = xt_ref[pl.ds(r0, slab), :].astype(jnp.float32)
            diff = xh - xt
            sq = diff * diff
            if row_limit is not None:
                inb = (row_iota + s * slab) < row_limit
                sq = jnp.where(inb, sq, jnp.float32(0.0))
            return acc_s + sq.reshape(groups, 8, LANES).sum(axis=0)

        acc_s = lax.fori_loop(0, n_slabs, body,
                              jnp.zeros((8, LANES), jnp.float32),
                              unroll=(n_slabs <= 4))
        acc_sum[...] += acc_s

    if ragged:
        @pl.when(i < steps - 1)
        def _interior():
            accumulate(None)

        @pl.when(i == steps - 1)
        def _edge():
            accumulate(rows - i * row_tile)
    else:
        accumulate(None)

    @pl.when(i == steps - 1)
    def _finalize():
        sum_ref[0] = jnp.sum(acc_sum[...])


def masked_mse_loss(x_hat, x_target, mask=None):
    """Pallas implementation of MSELoss_masked.forward. Returns an f32 scalar."""
    assert x_hat.shape == x_target.shape
    n = math.prod(x_hat.shape)
    if n == 0:
        return jnp.float32(0.0)

    use_mask = mask is not None
    if use_mask:
        assert mask.shape == x_hat.shape

    # Sublane packing of the narrowest streamed dtype (8 f32 / 16 bf16 / 32 int8,bool).
    dtypes = [x_hat.dtype, x_target.dtype] + ([mask.dtype] if use_mask else [])
    sub_mult = 8
    for dt in dtypes:
        sub_mult = max(sub_mult, 8 * max(1, 4 // max(1, jnp.dtype(dt).itemsize)))

    rows_raw = pl.cdiv(n, LANES)
    if rows_raw >= SLAB:
        # Large input: only 128-lane alignment is needed (zero-copy when n % 128 == 0);
        # the ragged last block is masked inside the kernel.
        n_aligned = _round_up(n, LANES)
    else:
        # Tiny input: single full-array block; round rows up to the sublane packing so
        # the in-kernel (groups, 8, 128) fold is legal.  Pad copy here is negligible.
        n_aligned = _round_up(n, sub_mult * LANES)
    pad = n_aligned - n
    rows = n_aligned // LANES

    if rows < SLAB:
        row_tile = rows
        slab = rows
    else:
        # Constant-bytes tiles in the *native* dtypes (the f32 cast happens in vregs).
        row_bytes = LANES * sum(jnp.dtype(dt).itemsize for dt in dtypes)
        budget_rows = max(SLAB, (_block_byte_budget() // (2 * row_bytes)) // SLAB * SLAB)
        row_tile = min(budget_rows, rows // SLAB * SLAB)
        slab = SLAB
    steps = pl.cdiv(rows, row_tile)
    ragged = (rows % row_tile) != 0

    def flat2d(a):
        a = a.reshape(-1)
        if pad > 0:  # only for small or non-128-aligned inputs
            a = jnp.pad(a, (0, pad))
        return a.reshape(rows, LANES)

    xh2 = flat2d(x_hat)
    xt2 = flat2d(x_target)

    in_spec = pl.BlockSpec((row_tile, LANES), lambda i: (i, 0))
    smem_spec = pl.BlockSpec(memory_space=pltpu.MemorySpace.SMEM)
    cparams = pltpu.CompilerParams(dimension_semantics=("arbitrary",))
    kern_kwargs = dict(row_tile=row_tile, slab=slab, rows=rows, steps=steps,
                       ragged=ragged)

    if use_mask:
        mk2 = flat2d(mask)  # padded mask entries are 0 -> never selected
        sum_out, cnt_out = pl.pallas_call(
            functools.partial(_masked_mse_kernel, **kern_kwargs),
            out_shape=(jax.ShapeDtypeStruct((1,), jnp.float32),
                       jax.ShapeDtypeStruct((1,), jnp.int32)),
            grid_spec=pltpu.PrefetchScalarGridSpec(
                num_scalar_prefetch=0,
                grid=(steps,),
                in_specs=[in_spec, in_spec, in_spec],
                out_specs=(smem_spec, smem_spec),
                scratch_shapes=[pltpu.VMEM((8, LANES), jnp.float32),
                                pltpu.VMEM((8, LANES), jnp.int32)]),
            compiler_params=cparams,
        )(xh2, xt2, mk2)
        sq_sum = sum_out[0]
        count = cnt_out[0]  # exact int32 count of selected elements
        mean = sq_sum / jnp.maximum(count, 1).astype(jnp.float32)
        return jnp.where(count > 0, mean, jnp.float32(0.0))
    else:
        sum_out = pl.pallas_call(
            functools.partial(_unmasked_mse_kernel, **kern_kwargs),
            out_shape=jax.ShapeDtypeStruct((1,), jnp.float32),
            grid_spec=pltpu.PrefetchScalarGridSpec(
                num_scalar_prefetch=0,
                grid=(steps,),
                in_specs=[in_spec, in_spec],
                out_specs=smem_spec,
                scratch_shapes=[pltpu.VMEM((8, LANES), jnp.float32)]),
            compiler_params=cparams,
        )(xh2, xt2)
        return sum_out[0] / jnp.float32(n)


if __name__ == "__main__":
    key = jax.random.PRNGKey(0)
    k1, k2, k3 = jax.random.split(key, 3)

    # Main case: NCHW tensors as implied by the module usage.
    shape = (2, 4, 16, 16)
    x_hat = jax.random.normal(k1, shape, dtype=jnp.float32)
    x_target = jax.random.normal(k2, shape, dtype=jnp.float32)
    mask = (jax.random.uniform(k3, shape) > 0.5).astype(jnp.float32)

    err_masked = masked_mse_loss(x_hat, x_target, mask)
    err_full = masked_mse_loss(x_hat, x_target, None)
    err_empty = masked_mse_loss(x_hat, x_target, jnp.zeros(shape, jnp.float32))
    jax.block_until_ready((err_masked, err_full, err_empty))

    ref_masked = jnp.sum(jnp.where(mask > 0, (x_hat - x_target) ** 2, 0.0)) / jnp.sum(mask > 0)
    ref_full = jnp.mean((x_hat - x_target) ** 2)
    assert jnp.allclose(err_masked, ref_masked, rtol=1e-5, atol=1e-6)
    assert jnp.allclose(err_full, ref_full, rtol=1e-5, atol=1e-6)
    assert float(err_empty) == 0.0

    # Non-128-aligned size: exercises the tiny-input padded single-block path.
    shape2 = (2, 3, 7, 5)
    xh2 = jax.random.normal(k1, shape2, dtype=jnp.float32)
    xt2 = jax.random.normal(k2, shape2, dtype=jnp.float32)
    mk2 = (jax.random.uniform(k3, shape2) > 0.3).astype(jnp.float32)
    e2 = masked_mse_loss(xh2, xt2, mk2)
    e2_full = masked_mse_loss(xh2, xt2, None)
    jax.block_until_ready((e2, e2_full))
    r2 = jnp.sum(jnp.where(mk2 > 0, (xh2 - xt2) ** 2, 0.0)) / jnp.sum(mk2 > 0)
    r2_full = jnp.mean((xh2 - xt2) ** 2)
    assert jnp.allclose(e2, r2, rtol=1e-5, atol=1e-6)
    assert jnp.allclose(e2_full, r2_full, rtol=1e-5, atol=1e-6)

    # Multi-block + ragged last block: exercises the zero-copy large path, the slab
    # loop, the edge-block row masking, and the in-kernel final reduce.
    shape3 = (2, 2, 514, 128)  # 263168 elems -> 2056 rows -> blocks of 2048 + ragged 8
    xh3 = jax.random.normal(k1, shape3, dtype=jnp.float32)
    xt3 = jax.random.normal(k2, shape3, dtype=jnp.float32)
    mk3 = (jax.random.uniform(k3, shape3) > 0.5).astype(jnp.float32)
    e3 = masked_mse_loss(xh3, xt3, mk3)
    e3_full = masked_mse_loss(xh3, xt3, None)
    jax.block_until_ready((e3, e3_full))
    r3 = jnp.sum(jnp.where(mk3 > 0, (xh3 - xt3) ** 2, 0.0)) / jnp.sum(mk3 > 0)
    r3_full = jnp.mean((xh3 - xt3) ** 2)
    assert jnp.allclose(e3, r3, rtol=1e-4, atol=1e-6)
    assert jnp.allclose(e3_full, r3_full, rtol=1e-4, atol=1e-6)

    print("KERNEL_OK")
</pallas_src>

<mosaic_0001>
module attributes {stable_mosaic.version = 11 : i64} {
  func.func @_masked_mse_kernel(%arg0: i32, %arg1: memref<16x128xf32, #tpu.memory_space<vmem>>, %arg2: memref<16x128xf32, #tpu.memory_space<vmem>>, %arg3: memref<16x128xf32, #tpu.memory_space<vmem>>, %arg4: memref<1xf32, #tpu.memory_space<smem>>, %arg5: memref<1xi32, #tpu.memory_space<smem>>, %arg6: memref<8x128xf32, #tpu.memory_space<vmem>>, %arg7: memref<8x128xi32, #tpu.memory_space<vmem>>) attributes {dimension_semantics = [#tpu.dimension_semantics<arbitrary>], iteration_bounds = array<i64: 1>, scalar_prefetch = 0 : i64, scratch_operands = 2 : i64, tpu.core_type = #tpu.core_type<tc>, window_params = [{transform_indices = @transform_0, window_bounds = array<i64: 16, 128>}, {transform_indices = @transform_1, window_bounds = array<i64: 16, 128>}, {transform_indices = @transform_2, window_bounds = array<i64: 16, 128>}, {transform_indices = @transform_3, window_bounds = array<i64: 1>}, {transform_indices = @transform_4, window_bounds = array<i64: 1>}]} {
    %c0_i32 = arith.constant 0 : i32
    %0 = arith.cmpi eq, %arg0, %c0_i32 : i32
    %1 = arith.extui %0 : i1 to i32
    %c0_i32_0 = arith.constant 0 : i32
    %2 = arith.cmpi ne, %1, %c0_i32_0 : i32
    scf.if %2 {
      %cst_19 = arith.constant 0.000000e+00 : f32
      %35 = vector.broadcast %cst_19 : f32 to vector<8x128xf32>
      %c0_20 = arith.constant 0 : index
      %c0_21 = arith.constant 0 : index
      %36 = vector.load %arg6[%c0_20, %c0_21] : memref<8x128xf32, #tpu.memory_space<vmem>>, vector<8x128xf32>
      tpu.vector_store %arg6[%c0_20, %c0_21], %35 {strides = array<i32>} : memref<8x128xf32, #tpu.memory_space<vmem>>, vector<8x128xf32>,
      %c0_i32_22 = arith.constant 0 : i32
      %37 = vector.broadcast %c0_i32_22 : i32 to vector<8x128xi32>
      %c0_23 = arith.constant 0 : index
      %c0_24 = arith.constant 0 : index
      %38 = vector.load %arg7[%c0_23, %c0_24] : memref<8x128xi32, #tpu.memory_space<vmem>>, vector<8x128xi32>
      tpu.vector_store %arg7[%c0_23, %c0_24], %37 {strides = array<i32>} : memref<8x128xi32, #tpu.memory_space<vmem>>, vector<8x128xi32>,
    } else {
    }
    %cst = arith.constant 0.000000e+00 : f32
    %3 = vector.broadcast %cst : f32 to vector<8x128xf32>
    %c0_i32_1 = arith.constant 0 : i32
    %4 = vector.broadcast %c0_i32_1 : i32 to vector<8x128xi32>
    %c0_i32_2 = arith.constant 0 : i32
    %c16_i32 = arith.constant 16 : i32
    %5 = arith.muli %c0_i32_2, %c16_i32 : i32
    %6 = tpu.assume_multiple %5, 16 : i32
    %7 = arith.index_cast %6 : i32 to index
    %c0 = arith.constant 0 : index
    %8 = vector.load %arg1[%7, %c0] : memref<16x128xf32, #tpu.memory_space<vmem>>, vector<16x128xf32>
    %9 = arith.index_cast %6 : i32 to index
    %c0_3 = arith.constant 0 : index
    %10 = vector.load %arg2[%9, %c0_3] : memref<16x128xf32, #tpu.memory_space<vmem>>, vector<16x128xf32>
    %11 = arith.subf %8, %10 : vector<16x128xf32>
    %12 = arith.index_cast %6 : i32 to index
    %c0_4 = arith.constant 0 : index
    %13 = vector.load %arg3[%12, %c0_4] : memref<16x128xf32, #tpu.memory_space<vmem>>, vector<16x128xf32>
    %cst_5 = arith.constant 0.000000e+00 : f32
    %14 = vector.broadcast %cst_5 : f32 to vector<16x128xf32>
    %15 = arith.cmpf ogt, %13, %14 : vector<16x128xf32>
    %16 = arith.mulf %11, %11 : vector<16x128xf32>
    %cst_6 = arith.constant 0.000000e+00 : f32
    %17 = vector.broadcast %cst_6 : f32 to vector<16x128xf32>
    %18 = arith.select %15, %16, %17 : vector<16x128xi1>, vector<16x128xf32>
    %19 = arith.extui %15 : vector<16x128xi1> to vector<16x128xi32>
    %20 = vector.shape_cast %18 : vector<16x128xf32> to vector<2x8x128xf32>
    %cst_7 = arith.constant dense<0.000000e+00> : vector<8x128xf32>
    %21 = vector.multi_reduction <add>, %20, %cst_7 [0] : vector<2x8x128xf32> to vector<8x128xf32>
    %22 = arith.addf %3, %21 : vector<8x128xf32>
    %23 = vector.shape_cast %19 : vector<16x128xi32> to vector<2x8x128xi32>
    %cst_8 = arith.constant dense<0> : vector<8x128xi32>
    %24 = vector.multi_reduction <add>, %23, %cst_8 [0] : vector<2x8x128xi32> to vector<8x128xi32>
    %25 = arith.addi %4, %24 : vector<8x128xi32>
    %c1_i32 = arith.constant 1 : i32
    %c0_9 = arith.constant 0 : index
    %c0_10 = arith.constant 0 : index
    %26 = vector.load %arg6[%c0_9, %c0_10] : memref<8x128xf32, #tpu.memory_space<vmem>>, vector<8x128xf32>
    %27 = arith.addf %26, %22 : vector<8x128xf32>
    %c0_11 = arith.constant 0 : index
    %c0_12 = arith.constant 0 : index
    %28 = vector.load %arg6[%c0_11, %c0_12] : memref<8x128xf32, #tpu.memory_space<vmem>>, vector<8x128xf32>
    tpu.vector_store %arg6[%c0_11, %c0_12], %27 {strides = array<i32>} : memref<8x128xf32, #tpu.memory_space<vmem>>, vector<8x128xf32>,
    %c0_13 = arith.constant 0 : index
    %c0_14 = arith.constant 0 : index
    %29 = vector.load %arg7[%c0_13, %c0_14] : memref<8x128xi32, #tpu.memory_space<vmem>>, vector<8x128xi32>
    %30 = arith.addi %29, %25 : vector<8x128xi32>
    %c0_15 = arith.constant 0 : index
    %c0_16 = arith.constant 0 : index
    %31 = vector.load %arg7[%c0_15, %c0_16] : memref<8x128xi32, #tpu.memory_space<vmem>>, vector<8x128xi32>
    tpu.vector_store %arg7[%c0_15, %c0_16], %30 {strides = array<i32>} : memref<8x128xi32, #tpu.memory_space<vmem>>, vector<8x128xi32>,
    %c0_i32_17 = arith.constant 0 : i32
    %32 = arith.cmpi eq, %arg0, %c0_i32_17 : i32
    %33 = arith.extui %32 : i1 to i32
    %c0_i32_18 = arith.constant 0 : i32
    %34 = arith.cmpi ne, %33, %c0_i32_18 : i32
    scf.if %34 {
      %c0_19 = arith.constant 0 : index
      %c0_20 = arith.constant 0 : index
      %35 = vector.load %arg6[%c0_19, %c0_20] : memref<8x128xf32, #tpu.memory_space<vmem>>, vector<8x128xf32>
      %36 = vector.shape_cast %35 : vector<8x128xf32> to vector<1x8x128xf32>
      %cst_21 = arith.constant dense<0.000000e+00> : vector<1xf32>
      %37 = vector.multi_reduction <add>, %36, %cst_21 [1, 2] : vector<1x8x128xf32> to vector<1xf32>
      %38 = vector.shape_cast %37 : vector<1xf32> to vector<1x1x1xf32>
      %39 = vector.extract %38[0, 0, 0] : f32 from vector<1x1x1xf32>
      %c0_22 = arith.constant 0 : index
      %40 = memref.load %arg4[%c0_22] : memref<1xf32, #tpu.memory_space<smem>>
      memref.store %39, %arg4[%c0_22] : memref<1xf32, #tpu.memory_space<smem>>
      %c0_23 = arith.constant 0 : index
      %c0_24 = arith.constant 0 : index
      %41 = vector.load %arg7[%c0_23, %c0_24] : memref<8x128xi32, #tpu.memory_space<vmem>>, vector<8x128xi32>
      %42 = vector.shape_cast %41 : vector<8x128xi32> to vector<1x8x128xi32>
      %cst_25 = arith.constant dense<0> : vector<1xi32>
      %43 = vector.multi_reduction <add>, %42, %cst_25 [1, 2] : vector<1x8x128xi32> to vector<1xi32>
      %44 = vector.shape_cast %43 : vector<1xi32> to vector<1x1x1xi32>
      %45 = vector.extract %44[0, 0, 0] : i32 from vector<1x1x1xi32>
      %c0_26 = arith.constant 0 : index
      %46 = memref.load %arg5[%c0_26] : memref<1xi32, #tpu.memory_space<smem>>
      memref.store %45, %arg5[%c0_26] : memref<1xi32, #tpu.memory_space<smem>>
    } else {
    }
    return
  }
  func.func @transform_0(%arg0: i32) -> (i32, i32) {
    %c0_i32 = arith.constant 0 : i32
    %c0_i32_0 = arith.constant 0 : i32
    return %arg0, %c0_i32 : i32, i32
  }
  func.func @transform_1(%arg0: i32) -> (i32, i32) {
    %c0_i32 = arith.constant 0 : i32
    %c0_i32_0 = arith.constant 0 : i32
    return %arg0, %c0_i32 : i32, i32
  }
  func.func @transform_2(%arg0: i32) -> (i32, i32) {
    %c0_i32 = arith.constant 0 : i32
    %c0_i32_0 = arith.constant 0 : i32
    return %arg0, %c0_i32 : i32, i32
  }
  func.func @transform_3(%arg0: i32) -> i32 {
    %c0_i32 = arith.constant 0 : i32
    %c0_i32_0 = arith.constant 0 : i32
    return %c0_i32 : i32
  }
  func.func @transform_4(%arg0: i32) -> i32 {
    %c0_i32 = arith.constant 0 : i32
    %c0_i32_0 = arith.constant 0 : i32
    return %c0_i32 : i32
  }
}

</mosaic_0001>

<llo_original>
// kernel: tpu_custom_call.1
$region0: #{tpu_custom_call.1}
  #allocation0 [shape = 'u32[]', space=smem, size = 0x4, offset = 0x4, fixed_abs, tag = 'smem constant byte address 0x4 - core index']
  #allocation1 [shape = 'u32[144,128]{1,0:T(1,128)}', space=vmem, size = 0x12000, scoped, tag = 'internal scratch']
  #allocation2 [shape = 'f32[8,128]{1,0:T(8,128)}', space=vmem, size = 0x1000, scoped, tag = 'scratch operand']
  #allocation3 [shape = 's32[8,128]{1,0:T(8,128)}', space=vmem, size = 0x1000, scoped, tag = 'scratch operand']
  %s0 = inlined_call_operand.hbm [shape: f32[16,128], index: 0, kind: input, shape index: {}]
  %s1 = inlined_call_operand.hbm [shape: f32[16,128], index: 1, kind: input, shape index: {}]
  %s2 = inlined_call_operand.hbm [shape: f32[16,128], index: 2, kind: input, shape index: {}]
  %s3 = inlined_call_operand.hbm [shape: f32[1], index: 3, kind: output, shape index: {0}]
  %s4 = inlined_call_operand.hbm [shape: s32[1], index: 4, kind: output, shape index: {1}]
  %5 = xla_tuple %s3, %s4
  %s6 = sld [smem:[#allocation0]]
  $region50: #{tpu_custom_call.1} parent=0
    _
  %s8 = ssub.s32 1, %s6
  %s9 = scalar_select 0, %s8, %s6
  $region1: #{tpu_custom_call.1} parent=0
    #allocation4 [shape = 'u8[8192]{0}', space=vmem, size = 0x2000, scoped, tag = 'input window, operand 0, single buffered']
    #allocation5 [shape = 's32[1]{0}', space=sflag, size = 0x4, scoped, tag = 'scoped memory for tpu_custom_call.1']
    #allocation6 [shape = 's32[1]{0}', space=sflag, size = 0x4, scoped, tag = 'scoped memory for tpu_custom_call.1']
    #allocation7 [shape = 'u8[8192]{0}', space=vmem, size = 0x2000, scoped, tag = 'input window, operand 1, single buffered']
    #allocation8 [shape = 's32[1]{0}', space=sflag, size = 0x4, scoped, tag = 'scoped memory for tpu_custom_call.1']
    #allocation9 [shape = 'u8[8192]{0}', space=vmem, size = 0x2000, scoped, tag = 'input window, operand 2, single buffered']
    #allocation10 [shape = 'u8[512]{0}', space=smem, size = 0x200, scoped, tag = 'output window, operand 0, single buffered']
    #allocation11 [shape = 'u8[512]{0}', space=smem, size = 0x200, scoped, tag = 'output window, operand 1, single buffered']
    #allocation12 [shape = 's32[1]{0}', space=sflag, size = 0x4, scoped, tag = 'scoped memory for tpu_custom_call.1']
    %10 = vsyncpa [#allocation5], 0
    %11 = vsyncpa [#allocation8], 0
    %12 = vsyncpa [#allocation6], 0
    %13 = vsyncpa [#allocation12], 0
    // Predicated region
    $region2: #{tpu_custom_call.1} parent=1 // pred_check
      _
    $region3: #{tpu_custom_call.1} parent=1 // pred_check_branch
      %15 = sbr.rel (0) target = $region5
    $region4: #{tpu_custom_call.1} parent=1 // pred_region
      %s17 = ssub.s32 256, 256
      %18 = vsyncadd [#allocation5], %s17
      %s19 = sshll.u32 [#allocation4], 4
      %s20 = int_to_ptr.vmem [resolvable:$true] %s19
      %25 = dma.hbm_to_vmem [thread:$0]  %s0, 256, %s20, [#allocation5], 128, 128, 8
    $region5: #{tpu_custom_call.1} parent=1 // pred_fallthru
      _
    // Predicated region
    $region6: #{tpu_custom_call.1} parent=1 // pred_check
      _
    $region7: #{tpu_custom_call.1} parent=1 // pred_check_branch
      %27 = sbr.rel (0) target = $region9
    $region8: #{tpu_custom_call.1} parent=1 // pred_region
      %s29 = ssub.s32 256, 256
      %30 = vsyncadd [#allocation8], %s29
      %s31 = sshll.u32 [#allocation7], 4
      %s32 = int_to_ptr.vmem [resolvable:$true] %s31
      %37 = dma.hbm_to_vmem [thread:$0]  %s1, 256, %s32, [#allocation8], 128, 128, 8
    $region9: #{tpu_custom_call.1} parent=1 // pred_fallthru
      _
    // Predicated region
    $region10: #{tpu_custom_call.1} parent=1 // pred_check
      _
    $region11: #{tpu_custom_call.1} parent=1 // pred_check_branch
      %39 = sbr.rel (0) target = $region13
    $region12: #{tpu_custom_call.1} parent=1 // pred_region
      %s41 = ssub.s32 256, 256
      %42 = vsyncadd [#allocation8], %s41
      %s43 = sshll.u32 [#allocation9], 4
      %s44 = int_to_ptr.vmem [resolvable:$true] %s43
      %49 = dma.hbm_to_vmem [thread:$0]  %s2, 256, %s44, [#allocation8], 128, 128, 8
    $region13: #{tpu_custom_call.1} parent=1 // pred_fallthru
      _
    // Predicated region
    $region14: #{tpu_custom_call.1} parent=1 // pred_check
      _
    $region15: #{tpu_custom_call.1} parent=1 // pred_check_branch
      %51 = sbr.rel (0) target = $region17
    $region16: #{tpu_custom_call.1} parent=1 // pred_region
      %52 = dma.done [#allocation5], 256
    $region17: #{tpu_custom_call.1} parent=1 // pred_fallthru
      _
    // Predicated region
    $region18: #{tpu_custom_call.1} parent=1 // pred_check
      _
    $region19: #{tpu_custom_call.1} parent=1 // pred_check_branch
      %54 = sbr.rel (0) target = $region21
    $region20: #{tpu_custom_call.1} parent=1 // pred_region
      %55 = dma.done [#allocation8], 256
    $region21: #{tpu_custom_call.1} parent=1 // pred_fallthru
      _
    // Predicated region
    $region22: #{tpu_custom_call.1} parent=1 // pred_check
      _
    $region23: #{tpu_custom_call.1} parent=1 // pred_check_branch
      %57 = sbr.rel (0) target = $region25
    $region24: #{tpu_custom_call.1} parent=1 // pred_region
      %58 = dma.done [#allocation8], 256
    $region25: #{tpu_custom_call.1} parent=1 // pred_fallthru
      _
    %p59 = scmp.eq.s32.totalorder 0, 0
    // Predicated region
    $region26: #{tpu_custom_call.1} parent=1 // pred_check
      %p60 = pneg %p59
    $region27: #{tpu_custom_call.1} parent=1 // pred_check_branch
      %62 = sbr.rel (%p60) target = $region29
    $region28: #{tpu_custom_call.1} parent=1 // pred_region
      %63 = vst [vmem:[#allocation2] sm:$0xff] 0.0
      %64 = vst [vmem:[#allocation3] sm:$0xff] 0
    $region29: #{tpu_custom_call.1} parent=1 // pred_fallthru
      _
    %v65 = vld [vmem:[#allocation4] sm:$0xff]
    %v66 = vld [vmem:[#allocation4 + $0x8] sm:$0xff]
    %v67 = vld [vmem:[#allocation7] sm:$0xff]
    %v68 = vld [vmem:[#allocation7 + $0x8] sm:$0xff]
    %v69 = vsub.f32 %v65, %v67
    %v70 = vsub.f32 %v66, %v68
    %v71 = vld [vmem:[#allocation9] sm:$0xff]
    %v72 = vld [vmem:[#allocation9 + $0x8] sm:$0xff]
    %vm73 = vcmp.gt.f32.partialorder %v71, 0.0
    %vm74 = vcmp.gt.f32.partialorder %v72, 0.0
    %v75 = vmul.f32 %v69, %v69
    %v76 = vmul.f32 %v70, %v70
    %v77 = vsel %vm73, %v75, 0.0
    %v78 = vsel %vm74, %v76, 0.0
    %v79 = vsel %vm73, 1, 0
    %v80 = vsel %vm74, 1, 0
    %v81 = vadd.f32 %v77, %v78
    %v82 = vadd.f32 %v81, 0.0
    %v83 = vadd.s32 %v79, %v80
    %v84 = vld [vmem:[#allocation2] sm:$0xff]
    %v85 = vadd.f32 %v84, %v82
    %86 = vst [vmem:[#allocation2] sm:$0xff] %v85
    %v87 = vld [vmem:[#allocation3] sm:$0xff]
    %v88 = vadd.s32 %v87, %v83
    %89 = vst [vmem:[#allocation3] sm:$0xff] %v88
    // Predicated region
    $region30: #{tpu_custom_call.1} parent=1 // pred_check
      %p90 = pneg %p59
    $region31: #{tpu_custom_call.1} parent=1 // pred_check_branch
      %92 = sbr.rel (%p90) target = $region33
    $region32: #{tpu_custom_call.1} parent=1 // pred_region
      %v93 = vld [vmem:[#allocation2] sm:$0xff]
      %94 = vadd.xlane.f32.xlu0 %v93
      %v95 = vpop.xlane.xlu0 %94
      %v96 = vrot.slane %v95, 4
      %v97 = vadd.f32 %v95, %v96
      %v98 = vrot.slane %v97, 2
      %v99 = vadd.f32 %v97, %v98
      %v100 = vrot.slane %v99, 1
      %v101 = vadd.f32 %v99, %v100
      %s102 = vtos %v101
      %s103 = scalar_lea.smem [#allocation10], 0
      %104 = sst [smem:[%s103]] %s102
      %v105 = vld [vmem:[#allocation3] sm:$0xff]
      %v106 = vand.u32 %v105, 65535
      %v107 = vshrl.u32 %v105, 16
      %v108 = vcvt.s32.f32 %v106
      %v109 = vcvt.s32.f32 %v107
      %110 = vadd.xlane.f32.xlu0 %v108
      %v111 = vpop.xlane.xlu0 %110
      %112 = vadd.xlane.f32.xlu0 %v109
      %v113 = vpop.xlane.xlu0 %112
      %v114 = vcvt.f32.s32 %v111
      %v115 = vcvt.f32.s32 %v113
      %v116 = vshll.u32 %v115, 16
      %v117 = vadd.s32 %v116, %v114
      %v118 = vrot.slane %v117, 4
      %v119 = vadd.s32 %v117, %v118
      %v120 = vrot.slane %v119, 2
      %v121 = vadd.s32 %v119, %v120
      %v122 = vrot.slane %v121, 1
      %v123 = vadd.s32 %v121, %v122
      %s124 = vtos %v123
      %s125 = scalar_lea.smem [#allocation11], 0
      %126 = sst [smem:[%s125]] %s124
    $region33: #{tpu_custom_call.1} parent=1 // pred_fallthru
      _
    // Predicated region
    $region34: #{tpu_custom_call.1} parent=1 // pred_check
      _
    $region35: #{tpu_custom_call.1} parent=1 // pred_check_branch
      %128 = sbr.rel (0) target = $region37
    $region36: #{tpu_custom_call.1} parent=1 // pred_region
      %s130 = ssub.s32 16, 16
      %131 = vsyncadd [#allocation6], %s130
      %134 = dma.smem_to_hbm [#allocation10], 16, %s3, [#allocation6]
    $region37: #{tpu_custom_call.1} parent=1 // pred_fallthru
      _
    // Predicated region
    $region38: #{tpu_custom_call.1} parent=1 // pred_check
      _
    $region39: #{tpu_custom_call.1} parent=1 // pred_check_branch
      %136 = sbr.rel (0) target = $region41
    $region40: #{tpu_custom_call.1} parent=1 // pred_region
      %s138 = ssub.s32 16, 16
      %139 = vsyncadd [#allocation12], %s138
      %142 = dma.smem_to_hbm [#allocation11], 16, %s4, [#allocation12]
    $region41: #{tpu_custom_call.1} parent=1 // pred_fallthru
      _
    // Predicated region
    $region42: #{tpu_custom_call.1} parent=1 // pred_check
      _
    $region43: #{tpu_custom_call.1} parent=1 // pred_check_branch
      %144 = sbr.rel (0) target = $region45
    $region44: #{tpu_custom_call.1} parent=1 // pred_region
      %145 = dma.done [#allocation6], 16
    $region45: #{tpu_custom_call.1} parent=1 // pred_fallthru
      _
    // Predicated region
    $region46: #{tpu_custom_call.1} parent=1 // pred_check
      _
    $region47: #{tpu_custom_call.1} parent=1 // pred_check_branch
      %147 = sbr.rel (0) target = $region49
    $region48: #{tpu_custom_call.1} parent=1 // pred_region
      %148 = dma.done [#allocation12], 16
    $region49: #{tpu_custom_call.1} parent=1 // pred_fallthru
      _
    %149 = sfence
    %150 = vsyncpa [#allocation5], 1
    %151 = vsyncpa [#allocation8], 1
    %152 = vsyncpa [#allocation6], 1
    %153 = vsyncpa [#allocation12], 1

</llo_original>
